<compile_context>
chip_gen: v7x
topology: tpu7x:2x2x1
jax: 0.10.0
libtpu: 0.0.40
codegen_flags: <defaults>
</compile_context>

<pallas_src>
import jax
import jax.numpy as jnp
from jax.experimental import pallas as pl
from jax.experimental.pallas import tpu as pltpu

IN_FEATURES = 64
OUT_FEATURES = 100
OUT_PADDED = 128          # next multiple of 128 for lane-dense stores
ROW_TILE_MAX = 1024       # multiple of 8; ~1.5 MiB of double-buffered tiles -> safe on v7x (64 MiB VMEM)


def _round_up(n, m):
    return ((n + m - 1) // m) * m


def linear_kernel(x_ref, wt_ref, b_ref, o_ref):
    # x_ref:  [tile, 64]   f32   (VMEM, streamed per grid step)
    # wt_ref: [64, 128]    bf16  (VMEM, resident; W^T zero-padded on lanes)
    # b_ref:  [1, 128]     f32   (VMEM, resident; bias zero-padded on lanes)
    # o_ref:  [tile, 128]  f32   (VMEM, lane-dense output slab)
    x_bf16 = x_ref[...].astype(jnp.bfloat16)
    acc = jnp.dot(x_bf16, wt_ref[...], preferred_element_type=jnp.float32)
    o_ref[...] = (acc + b_ref[...]).astype(o_ref.dtype)


def prepare_retrain_params(weight, bias):
    """One-time (parameter-load time) prep: transpose + pad + bf16 cast.

    weight: [100, 64] float32 (PyTorch Linear layout [out, in])
    bias:   [100]     float32
    returns (wt_padded [64, 128] bf16, bias_padded [1, 128] f32)

    Padded lanes (100..127) carry zero weight and zero bias, so they produce
    exactly-zero outputs. If these logits feed a softmax/argmax downstream,
    set the padded bias lanes to a large negative value here instead.
    """
    wt_padded = jnp.zeros((IN_FEATURES, OUT_PADDED), jnp.bfloat16)
    wt_padded = wt_padded.at[:, :OUT_FEATURES].set(weight.T.astype(jnp.bfloat16))
    b_padded = jnp.zeros((1, OUT_PADDED), jnp.float32)
    b_padded = b_padded.at[0, :OUT_FEATURES].set(bias.astype(jnp.float32))
    return wt_padded, b_padded


def retrain_model_forward(x, wt_padded, b_padded, *, trim=False):
    """Pallas equivalent of ReTrainModel.forward.

    x:         [B, 64]   float32
    wt_padded: [64, 128] bf16  (pre-transposed, zero-padded weight)
    b_padded:  [1, 128]  f32   (zero-padded bias)
    returns    [B, 128]  f32 lane-dense slab (lanes 100..127 are 0),
               or [B, 100] if trim=True.
    """
    B = x.shape[0]
    tile_rows = min(ROW_TILE_MAX, _round_up(B, 8))
    b_pad = _round_up(B, tile_rows)
    if b_pad != B:
        x = jnp.pad(x, ((0, b_pad - B), (0, 0)))
    grid = (b_pad // tile_rows,)

    flops = 2 * b_pad * IN_FEATURES * OUT_PADDED
    bytes_accessed = (
        b_pad * IN_FEATURES * 4          # x (f32)
        + IN_FEATURES * OUT_PADDED * 2   # W^T (bf16)
        + OUT_PADDED * 4                 # bias (f32)
        + b_pad * OUT_PADDED * 4         # out (f32)
    )

    out = pl.pallas_call(
        linear_kernel,
        out_shape=jax.ShapeDtypeStruct((b_pad, OUT_PADDED), jnp.float32),
        grid=grid,
        in_specs=[
            pl.BlockSpec((tile_rows, IN_FEATURES), lambda i: (i, 0)),   # x: streamed
            pl.BlockSpec((IN_FEATURES, OUT_PADDED), lambda i: (0, 0)),  # W^T: resident
            pl.BlockSpec((1, OUT_PADDED), lambda i: (0, 0)),            # bias: resident
        ],
        out_specs=pl.BlockSpec((tile_rows, OUT_PADDED), lambda i: (i, 0)),
        compiler_params=pltpu.CompilerParams(
            dimension_semantics=("parallel",),
        ),
        cost_estimate=pl.CostEstimate(
            flops=flops, transcendentals=0, bytes_accessed=bytes_accessed
        ),
    )(x, wt_padded, b_padded)

    if b_pad != B:
        out = out[:B]
    if trim:
        out = out[:, :OUT_FEATURES]
    return out


if __name__ == "__main__":
    key = jax.random.PRNGKey(0)
    k_x, k_w, k_b = jax.random.split(key, 3)

    B = 8  # small, multiple of 8 (f32 sublanes)

    # Deterministic parameter init (mimics PyTorch's default uniform bound 1/sqrt(in)).
    bound = 1.0 / (IN_FEATURES ** 0.5)
    weight = jax.random.uniform(k_w, (OUT_FEATURES, IN_FEATURES), jnp.float32, -bound, bound)
    bias = jax.random.uniform(k_b, (OUT_FEATURES,), jnp.float32, -bound, bound)
    x = jax.random.normal(k_x, (B, IN_FEATURES), jnp.float32)

    # One-time parameter prep (transpose + pad + bf16 cast), outside the hot path.
    wt_padded, b_padded = prepare_retrain_params(weight, bias)
    wt_padded, b_padded = jax.block_until_ready((wt_padded, b_padded))

    # Hot path: lane-dense [B, 128] slab, no trailing slice.
    out_slab = retrain_model_forward(x, wt_padded, b_padded)
    out_slab = jax.block_until_ready(out_slab)
    assert out_slab.shape == (B, OUT_PADDED)

    # Correctness: first 100 lanes match the f32 reference (bf16-weight tolerance),
    # padded lanes are exactly zero.
    ref = x @ weight.T + bias
    out = out_slab[:, :OUT_FEATURES]
    assert jnp.allclose(out, ref, atol=2e-2, rtol=2e-2)
    assert jnp.all(out_slab[:, OUT_FEATURES:] == 0.0)

    # API-compatible trimmed view also works.
    out_trim = jax.block_until_ready(
        retrain_model_forward(x, wt_padded, b_padded, trim=True))
    assert out_trim.shape == (B, OUT_FEATURES)
    assert jnp.allclose(out_trim, ref, atol=2e-2, rtol=2e-2)

    print("KERNEL_OK")
</pallas_src>

<mosaic_0001>
module attributes {stable_mosaic.version = 11 : i64} {
  func.func @linear_kernel(%arg0: i32, %arg1: memref<8x64xf32, #tpu.memory_space<vmem>>, %arg2: memref<64x128xbf16, #tpu.memory_space<vmem>>, %arg3: memref<1x128xf32, #tpu.memory_space<vmem>>, %arg4: memref<8x128xf32, #tpu.memory_space<vmem>>) attributes {dimension_semantics = [#tpu.dimension_semantics<parallel>], iteration_bounds = array<i64: 1>, scalar_prefetch = 0 : i64, scratch_operands = 0 : i64, tpu.core_type = #tpu.core_type<tc>, window_params = [{transform_indices = @transform_0, window_bounds = array<i64: 8, 64>}, {pipeline_mode = #tpu.pipeline_mode<synchronous>, transform_indices = @transform_1, window_bounds = array<i64: 64, 128>}, {pipeline_mode = #tpu.pipeline_mode<synchronous>, transform_indices = @transform_2, window_bounds = array<i64: 1, 128>}, {transform_indices = @transform_3, window_bounds = array<i64: 8, 128>}]} {
    %c0 = arith.constant 0 : index
    %c0_0 = arith.constant 0 : index
    %0 = vector.load %arg1[%c0, %c0_0] : memref<8x64xf32, #tpu.memory_space<vmem>>, vector<8x64xf32>
    %1 = arith.truncf %0 : vector<8x64xf32> to vector<8x64xbf16>
    %c0_1 = arith.constant 0 : index
    %c0_2 = arith.constant 0 : index
    %2 = vector.load %arg2[%c0_1, %c0_2] : memref<64x128xbf16, #tpu.memory_space<vmem>>, vector<64x128xbf16>
    %cst = arith.constant dense<0.000000e+00> : vector<8x128xf32>
    %3 = tpu.matmul %1, %2, %cst {dimension_numbers = #tpu.dot_dimension_numbers<[1], [0], [0], [1], [0, 0, 1, 1], [], []>} : vector<8x64xbf16>, vector<64x128xbf16>, vector<8x128xf32> -> vector<8x128xf32>
    %c0_3 = arith.constant 0 : index
    %c0_4 = arith.constant 0 : index
    %4 = vector.load %arg3[%c0_3, %c0_4] : memref<1x128xf32, #tpu.memory_space<vmem>>, vector<1x128xf32>
    %5 = vector.broadcast %4 : vector<1x128xf32> to vector<8x128xf32>
    %6 = arith.addf %3, %5 : vector<8x128xf32>
    %c0_5 = arith.constant 0 : index
    %c0_6 = arith.constant 0 : index
    %7 = vector.load %arg4[%c0_5, %c0_6] : memref<8x128xf32, #tpu.memory_space<vmem>>, vector<8x128xf32>
    tpu.vector_store %arg4[%c0_5, %c0_6], %6 {strides = array<i32>} : memref<8x128xf32, #tpu.memory_space<vmem>>, vector<8x128xf32>,
    return
  }
  func.func @transform_0(%arg0: i32) -> (i32, i32) {
    %c0_i32 = arith.constant 0 : i32
    %c0_i32_0 = arith.constant 0 : i32
    return %arg0, %c0_i32 : i32, i32
  }
  func.func @transform_1(%arg0: i32) -> (i32, i32) {
    %c0_i32 = arith.constant 0 : i32
    %c0_i32_0 = arith.constant 0 : i32
    %c0_i32_1 = arith.constant 0 : i32
    return %c0_i32, %c0_i32_0 : i32, i32
  }
  func.func @transform_2(%arg0: i32) -> (i32, i32) {
    %c0_i32 = arith.constant 0 : i32
    %c0_i32_0 = arith.constant 0 : i32
    %c0_i32_1 = arith.constant 0 : i32
    return %c0_i32, %c0_i32_0 : i32, i32
  }
  func.func @transform_3(%arg0: i32) -> (i32, i32) {
    %c0_i32 = arith.constant 0 : i32
    %c0_i32_0 = arith.constant 0 : i32
    return %arg0, %c0_i32 : i32, i32
  }
}

</mosaic_0001>

<llo_original>
// kernel: tpu_custom_call.1
$region0: #{tpu_custom_call.1}
  #allocation0 [shape = 'u32[]', space=smem, size = 0x4, offset = 0x4, fixed_abs, tag = 'smem constant byte address 0x4 - core index']
  #allocation1 [shape = 'u32[144,128]{1,0:T(1,128)}', space=vmem, size = 0x12000, scoped, tag = 'internal scratch']
  %s0 = inlined_call_operand.hbm [shape: f32[8,64], index: 0, kind: input, shape index: {}]
  %s1 = inlined_call_operand.hbm [shape: bf16[64,128], index: 1, kind: input, shape index: {}]
  %s2 = inlined_call_operand.vmem [shape: f32[1,128], index: 2, kind: input, shape index: {}]
  %s3 = inlined_call_operand.hbm [shape: f32[8,128], index: 3, kind: output, shape index: {}]
  %s4 = sld [smem:[#allocation0]]
  $region30: #{tpu_custom_call.1} parent=0
    _
  %s6 = ssub.s32 1, %s4
  %s7 = scalar_select 0, %s6, %s4
  $region1: #{tpu_custom_call.1} parent=0
    #allocation2 [shape = 'u8[4096]{0}', space=vmem, size = 0x1000, scoped, tag = 'input window, operand 0, single buffered']
    #allocation3 [shape = 's32[1]{0}', space=sflag, size = 0x4, scoped, tag = 'scoped memory for tpu_custom_call.1']
    #allocation4 [shape = 's32[1]{0}', space=sflag, size = 0x4, scoped, tag = 'scoped memory for tpu_custom_call.1']
    #allocation5 [shape = 'u8[16384]{0}', space=vmem, size = 0x4000, scoped, tag = 'input window, operand 1, single buffered']
    #allocation6 [shape = 's32[1]{0}', space=sflag, size = 0x4, scoped, tag = 'scoped memory for tpu_custom_call.1']
    #allocation7 [shape = 'u8[4096]{0}', space=vmem, size = 0x1000, scoped, tag = 'output window, operand 0, single buffered']
    %8 = vsyncpa [#allocation3], 0
    %9 = vsyncpa [#allocation6], 0
    %10 = vsyncpa [#allocation4], 0
    // Predicated region
    $region2: #{tpu_custom_call.1} parent=1 // pred_check
      _
    $region3: #{tpu_custom_call.1} parent=1 // pred_check_branch
      %12 = sbr.rel (0) target = $region5
    $region4: #{tpu_custom_call.1} parent=1 // pred_region
      %s14 = ssub.s32 128, 128
      %15 = vsyncadd [#allocation3], %s14
      %s17 = sshll.u32 [#allocation2], 4
      %s18 = int_to_ptr.vmem [resolvable:$true] %s17
      %20 = dma.hbm_to_vmem [thread:$0]  %s0, 128, %s18, [#allocation3]
    $region5: #{tpu_custom_call.1} parent=1 // pred_fallthru
      _
    // Predicated region
    $region6: #{tpu_custom_call.1} parent=1 // pred_check
      _
    $region7: #{tpu_custom_call.1} parent=1 // pred_check_branch
      %22 = sbr.rel (0) target = $region9
    $region8: #{tpu_custom_call.1} parent=1 // pred_region
      %s24 = ssub.s32 512, 512
      %25 = vsyncadd [#allocation6], %s24
      %s26 = sshll.u32 [#allocation5], 4
      %s27 = int_to_ptr.vmem [resolvable:$true] %s26
      %32 = dma.hbm_to_vmem [thread:$0]  %s1, 512, %s27, [#allocation6], 64, 64, 4
    $region9: #{tpu_custom_call.1} parent=1 // pred_fallthru
      _
    // Predicated region
    $region10: #{tpu_custom_call.1} parent=1 // pred_check
      _
    $region11: #{tpu_custom_call.1} parent=1 // pred_check_branch
      %34 = sbr.rel (0) target = $region13
    $region12: #{tpu_custom_call.1} parent=1 // pred_region
      _
    $region13: #{tpu_custom_call.1} parent=1 // pred_fallthru
      _
    // Predicated region
    $region14: #{tpu_custom_call.1} parent=1 // pred_check
      _
    $region15: #{tpu_custom_call.1} parent=1 // pred_check_branch
      %36 = sbr.rel (0) target = $region17
    $region16: #{tpu_custom_call.1} parent=1 // pred_region
      %37 = dma.done [#allocation3], 128
    $region17: #{tpu_custom_call.1} parent=1 // pred_fallthru
      _
    // Predicated region
    $region18: #{tpu_custom_call.1} parent=1 // pred_check
      _
    $region19: #{tpu_custom_call.1} parent=1 // pred_check_branch
      %39 = sbr.rel (0) target = $region21
    $region20: #{tpu_custom_call.1} parent=1 // pred_region
      %40 = dma.done [#allocation6], 512
    $region21: #{tpu_custom_call.1} parent=1 // pred_fallthru
      _
    %v42 = vld [vmem:[#allocation2] sm:$0xff]
    %v43 = vpack.c.bf16 %v42, %v42
    %v44 = vld [vmem:[#allocation5] sm:$0xf]
    %v45 = vld [vmem:[#allocation5 + $0x4] sm:$0xf]
    %v46 = vld [vmem:[#allocation5 + $0x8] sm:$0xf]
    %v47 = vld [vmem:[#allocation5 + $0xc] sm:$0xf]
    %v48 = vld [vmem:[#allocation5 + $0x10] sm:$0xf]
    %v49 = vld [vmem:[#allocation5 + $0x14] sm:$0xf]
    %v50 = vld [vmem:[#allocation5 + $0x18] sm:$0xf]
    %v51 = vld [vmem:[#allocation5 + $0x1c] sm:$0xf]
    %v52 = vld [vmem:[%s2] sm:$0x1]
    %v54 = vlaneseq
    %v55 = vshrl.u32 %v54, 7
    %v56 = vsub.s32 0, %v55
    %v57 = vrot.slane %v52, %v56
    %v67 = vunpack.c.l.b16 %v44
    %v68 = vunpack.c.l.b16 %v45
    %v69 = vunpack.c.l.b16 %v46
    %v70 = vunpack.c.l.b16 %v47
    %v71 = vunpack.c.l.b16 %v48
    %v72 = vunpack.c.l.b16 %v49
    %v73 = vunpack.c.l.b16 %v50
    %v74 = vunpack.c.l.b16 %v51
    %v75 = vpack.c.b16 %v68, %v67
    %v76 = vpack.c.b16 %v70, %v69
    %v77 = vpack.c.b16 %v72, %v71
    %v78 = vpack.c.b16 %v74, %v73
    %vm83 = vcmask 523264
    %v85 = vsel %vm83, %v43, 0
    %87 = vmatprep.subr.bf16.mxu0 0
    %88 = vmatpush1.bf16.msra.mxu0 %v75
    %89 = vmatprep.subr.bf16.mxu0 0
    %90 = vmatpush1.bf16.msra.mxu0 %v76
    %91 = vmatprep.subr.bf16.mxu0 0
    %92 = vmatpush1.bf16.msra.mxu0 %v77
    %93 = vmatprep.subr.bf16.mxu0 0
    %94 = vmatpush1.bf16.msra.mxu0 %v78
    %95 = vmatprep.subr.bf16.mxu0 0
    %96 = vmatpush1.bf16.msra.mxu0 0
    %97 = vmatprep.subr.bf16.mxu0 0
    %98 = vmatpush1.bf16.msra.mxu0 0
    %99 = vmatprep.subr.bf16.mxu0 0
    %100 = vmatpush1.bf16.msra.mxu0 0
    %101 = vmatprep.subr.bf16.mxu0 0
    %102 = vmatpush1.bf16.msra.mxu0 0
    %103 = vmatprep.subr.bf16.mxu0 0
    %104 = vmatpush1.bf16.msra.mxu0 0
    %105 = vmatprep.subr.bf16.mxu0 0
    %106 = vmatpush1.bf16.msra.mxu0 0
    %107 = vmatprep.subr.bf16.mxu0 0
    %108 = vmatpush1.bf16.msra.mxu0 0
    %109 = vmatprep.subr.bf16.mxu0 0
    %110 = vmatpush1.bf16.msra.mxu0 0
    %111 = vmatprep.subr.bf16.mxu0 0
    %112 = vmatpush1.bf16.msra.mxu0 0
    %113 = vmatprep.subr.bf16.mxu0 0
    %114 = vmatpush1.bf16.msra.mxu0 0
    %115 = vmatprep.subr.bf16.mxu0 0
    %116 = vmatpush1.bf16.msra.mxu0 0
    %117 = vmatprep.subr.bf16.mxu0 0
    %118 = vmatpush1.bf16.msra.mxu0 0
    %119 = vmatprep.mubr.bf16.mxu0 0
    %120 = vmatmul.mubr.bf16.gmra.mrb[0].mxu0 %v85
    %v121 = vpop.f32.mrb[0].mxu0
    %v122 = vadd.f32 %v57, %v121
    %v123 = vpop.f32.mrb[0].mxu0
    %v124 = vpop.f32.mrb[0].mxu0
    %v125 = vpop.f32.mrb[0].mxu0
    %126 = vdwg.mxu0
    %127 = vst [vmem:[#allocation7] sm:$0xff] %v122
    // Predicated region
    $region22: #{tpu_custom_call.1} parent=1 // pred_check
      _
    $region23: #{tpu_custom_call.1} parent=1 // pred_check_branch
      %129 = sbr.rel (0) target = $region25
    $region24: #{tpu_custom_call.1} parent=1 // pred_region
      %s131 = ssub.s32 128, 128
      %132 = vsyncadd [#allocation4], %s131
      %s134 = sshll.u32 [#allocation7], 4
      %s135 = int_to_ptr.vmem [resolvable:$true] %s134
      %137 = dma.vmem_to_hbm [thread:$0]  %s135, 128, %s3, [#allocation4]
    $region25: #{tpu_custom_call.1} parent=1 // pred_fallthru
      _
    // Predicated region
    $region26: #{tpu_custom_call.1} parent=1 // pred_check
      _
    $region27: #{tpu_custom_call.1} parent=1 // pred_check_branch
      %139 = sbr.rel (0) target = $region29
    $region28: #{tpu_custom_call.1} parent=1 // pred_region
      %140 = dma.done [#allocation4], 128
    $region29: #{tpu_custom_call.1} parent=1 // pred_fallthru
      _
    %141 = vsyncpa [#allocation3], 1
    %142 = vsyncpa [#allocation6], 1
    %143 = vsyncpa [#allocation4], 1

</llo_original>
